<compile_context>
chip_gen: v5e
topology: v5e:2x2
jax: 0.10.0
libtpu: 0.0.40
codegen_flags: <defaults>
</compile_context>

<pallas_src>
import functools

import jax
import jax.numpy as jnp
from jax.experimental import pallas as pl
from jax.experimental.pallas import tpu as pltpu


def _round_up(x: int, m: int) -> int:
    return ((x + m - 1) // m) * m


def _mlp_kernel(n_layers, *refs):
    """refs = (x_ref, w0, b0, w1, b1, ..., w_{L-1}, b_{L-1}, out_ref).

    Weights arrive as bf16 (MXU-native); biases as f32. Matmuls accumulate in
    f32 on the MXU; bias-add / ReLU stay in f32.
    """
    x_ref = refs[0]
    out_ref = refs[-1]
    param_refs = refs[1:-1]
    assert len(param_refs) == 2 * n_layers

    # Hoist the (1, out_i) bias loads out of the (unrolled) layer loop.
    b_vals = [param_refs[2 * i + 1][...] for i in range(n_layers)]

    h = x_ref[...]                                   # f32 (TB, in0)
    for i in range(n_layers):
        w = param_refs[2 * i][...]                   # bf16 (in_i, out_i)
        acc = jnp.dot(h.astype(jnp.bfloat16), w,
                      preferred_element_type=jnp.float32)
        h = acc + b_vals[i]                          # f32 epilogue
        if i < n_layers - 1:                         # ReLU on all but last
            h = jnp.maximum(h, 0.0)
    out_ref[...] = h.astype(out_ref.dtype)


def kernel_generator_mlp_forward(x, weights, biases, *, batch_tile=2048,
                                 out_dtype=jnp.float32):
    """Fused MLP forward.

    x: (batch, input_dim) f32.
    weights[i]: (in_i, out_i), f32 or pre-cast bf16 (pre-transposed vs torch).
    biases[i]:  (1, out_i) f32.
    Returns (batch, out_last) in `out_dtype` (f32 default = module semantics;
    bf16 halves the dominant HBM write stream at a small precision cost).
    """
    n_layers = len(weights)
    batch, in_dim = x.shape
    out_true = weights[-1].shape[1]

    # --- bf16 weights for the MXU (no-op if already bf16); biases stay f32. ---
    w_ops = [w if w.dtype == jnp.bfloat16 else w.astype(jnp.bfloat16)
             for w in weights]
    b_ops = [b.astype(jnp.float32) for b in biases]

    # --- Batch tiling: TB multiple of 8, capped at batch_tile; pad rows. ---
    tb = min(batch_tile, _round_up(batch, 8))
    # Keep >=4 grid steps when the batch allows it (v7x megacore sharding,
    # DMA/compute pipeline stays primed).
    if batch >= 4 * 8:
        tb = min(tb, _round_up(-(-batch // 4), 8))
    rows = _round_up(batch, tb)
    if rows != batch:
        x = jnp.pad(x, ((0, rows - batch), (0, 0)))
    grid = (rows // tb,)

    operands = [x]
    in_specs = [pl.BlockSpec((tb, in_dim), lambda i: (i, 0))]
    for w, b in zip(w_ops, b_ops):
        operands += [w, b]
        # Constant index_map -> weights/biases resident in VMEM across grid.
        in_specs += [pl.BlockSpec(w.shape, lambda i: (0, 0)),
                     pl.BlockSpec(b.shape, lambda i: (0, 0))]
    # Lane dim equals the full array dim (324) -> legal block shape; no
    # column padding, no wasted write bytes.
    out_specs = pl.BlockSpec((tb, out_true), lambda i: (i, 0))

    out_itemsize = jnp.dtype(out_dtype).itemsize
    flops = 2 * rows * sum(int(w.shape[0]) * int(w.shape[1]) for w in w_ops)
    bytes_accessed = int(
        x.size * x.dtype.itemsize
        + sum(o.size * o.dtype.itemsize for o in operands[1:])
        + rows * out_true * out_itemsize
    )

    kernel = functools.partial(_mlp_kernel, n_layers)
    out = pl.pallas_call(
        kernel,
        grid=grid,
        out_shape=jax.ShapeDtypeStruct((rows, out_true), out_dtype),
        in_specs=in_specs,
        out_specs=out_specs,
        compiler_params=pltpu.CompilerParams(
            dimension_semantics=("parallel",),
            # TB=2048 f32 out: ~5 MiB double-buffered out + ~5 MiB temporaries;
            # 32 MiB gives headroom over v5e's 16 MiB scoped default and is
            # well under v7x's 64 MiB physical VMEM.
            vmem_limit_bytes=32 * 1024 * 1024),
        cost_estimate=pl.CostEstimate(
            flops=flops, transcendentals=0, bytes_accessed=bytes_accessed),
    )(*operands)

    # Slice off padded batch rows (output columns are not padded).
    return out[:batch] if rows != batch else out


def init_params(key, input_dim, hidden_dim, num_kernels, kernel_sizes):
    """Deterministic synthetic parameters mirroring the torch module's shapes."""
    out_last = sum(
        k * k * c * n
        for k, c, n in zip(kernel_sizes, [1] + num_kernels[:-1], num_kernels)
    )
    layer_dims = [input_dim] + list(hidden_dim) + [out_last]

    weights, biases = [], []
    for i in range(len(layer_dims) - 1):
        d_in, d_out = layer_dims[i], layer_dims[i + 1]
        key, kw, kb = jax.random.split(key, 3)
        # torch.nn.Linear default init: U(-1/sqrt(fan_in), 1/sqrt(fan_in))
        bound = 1.0 / jnp.sqrt(jnp.float32(d_in))
        w = jax.random.uniform(kw, (d_in, d_out), jnp.float32, -bound, bound)
        b = jax.random.uniform(kb, (1, d_out), jnp.float32, -bound, bound)
        weights.append(w)
        biases.append(b)
    return weights, biases, out_last


def reference_forward_f32(x, weights, biases):
    h = x
    n = len(weights)
    for i, (w, b) in enumerate(zip(weights, biases)):
        h = h @ w + b
        if i < n - 1:
            h = jnp.maximum(h, 0.0)
    return h


def reference_forward_bf16(x, weights, biases):
    """Matches the kernel's numerics: bf16 dots, f32 accumulation/epilogue."""
    h = x.astype(jnp.float32)
    n = len(weights)
    for i, (w, b) in enumerate(zip(weights, biases)):
        h = jnp.dot(h.astype(jnp.bfloat16), w.astype(jnp.bfloat16),
                    preferred_element_type=jnp.float32) + b.astype(jnp.float32)
        if i < n - 1:
            h = jnp.maximum(h, 0.0)
    return h


if __name__ == "__main__":
    # Small config consistent with the module:
    #   input_dim=8, hidden_dim=[32, 32], num_kernels=[4, 8], kernel_sizes=[3, 3]
    #   -> final output dim = 3*3*1*4 + 3*3*4*8 = 324
    input_dim = 8
    hidden_dim = [32, 32]
    num_kernels = [4, 8]
    kernel_sizes = [3, 3]
    batch = 2

    key = jax.random.PRNGKey(0)
    key, kx = jax.random.split(key)
    x = jax.random.normal(kx, (batch, input_dim), jnp.float32)

    weights, biases, out_dim = init_params(
        key, input_dim, hidden_dim, num_kernels, kernel_sizes
    )

    # Pre-cast weights to bf16 once, outside the hot path (MXU-native dtype).
    weights_bf16 = [w.astype(jnp.bfloat16) for w in weights]

    out = kernel_generator_mlp_forward(x, weights_bf16, biases)
    out = jax.block_until_ready(out)

    assert out.shape == (batch, out_dim), out.shape
    assert out.dtype == jnp.float32, out.dtype

    # Exact-semantics check against a bf16-matching JAX reference.
    ref_bf16 = reference_forward_bf16(x, weights, biases)
    assert jnp.allclose(out, ref_bf16, atol=2e-3, rtol=2e-3), (
        float(jnp.max(jnp.abs(out - ref_bf16)))
    )

    # Loose check against the pure-f32 module semantics (bf16 rounding only).
    ref_f32 = reference_forward_f32(x, weights, biases)
    assert jnp.allclose(out, ref_f32, atol=1e-1, rtol=1e-2), (
        float(jnp.max(jnp.abs(out - ref_f32)))
    )

    print("KERNEL_OK")
</pallas_src>

<mosaic_0001>
module attributes {stable_mosaic.version = 11 : i64} {
  func.func @_mlp_kernel(%arg0: i32, %arg1: memref<8x8xf32, #tpu.memory_space<vmem>>, %arg2: memref<8x32xbf16, #tpu.memory_space<vmem>>, %arg3: memref<1x32xf32, #tpu.memory_space<vmem>>, %arg4: memref<32x32xbf16, #tpu.memory_space<vmem>>, %arg5: memref<1x32xf32, #tpu.memory_space<vmem>>, %arg6: memref<32x324xbf16, #tpu.memory_space<vmem>>, %arg7: memref<1x324xf32, #tpu.memory_space<vmem>>, %arg8: memref<8x324xf32, #tpu.memory_space<vmem>>) attributes {dimension_semantics = [#tpu.dimension_semantics<parallel>], iteration_bounds = array<i64: 1>, scalar_prefetch = 0 : i64, scratch_operands = 0 : i64, tpu.core_type = #tpu.core_type<tc>, window_params = [{transform_indices = @transform_0, window_bounds = array<i64: 8, 8>}, {pipeline_mode = #tpu.pipeline_mode<synchronous>, transform_indices = @transform_1, window_bounds = array<i64: 8, 32>}, {pipeline_mode = #tpu.pipeline_mode<synchronous>, transform_indices = @transform_2, window_bounds = array<i64: 1, 32>}, {pipeline_mode = #tpu.pipeline_mode<synchronous>, transform_indices = @transform_3, window_bounds = array<i64: 32, 32>}, {pipeline_mode = #tpu.pipeline_mode<synchronous>, transform_indices = @transform_4, window_bounds = array<i64: 1, 32>}, {pipeline_mode = #tpu.pipeline_mode<synchronous>, transform_indices = @transform_5, window_bounds = array<i64: 32, 324>}, {pipeline_mode = #tpu.pipeline_mode<synchronous>, transform_indices = @transform_6, window_bounds = array<i64: 1, 324>}, {transform_indices = @transform_7, window_bounds = array<i64: 8, 324>}]} {
    %c0 = arith.constant 0 : index
    %c0_0 = arith.constant 0 : index
    %0 = vector.load %arg3[%c0, %c0_0] : memref<1x32xf32, #tpu.memory_space<vmem>>, vector<1x32xf32>
    %c0_1 = arith.constant 0 : index
    %c0_2 = arith.constant 0 : index
    %1 = vector.load %arg5[%c0_1, %c0_2] : memref<1x32xf32, #tpu.memory_space<vmem>>, vector<1x32xf32>
    %c0_3 = arith.constant 0 : index
    %c0_4 = arith.constant 0 : index
    %2 = vector.load %arg7[%c0_3, %c0_4] : memref<1x324xf32, #tpu.memory_space<vmem>>, vector<1x324xf32>
    %c0_5 = arith.constant 0 : index
    %c0_6 = arith.constant 0 : index
    %3 = vector.load %arg1[%c0_5, %c0_6] : memref<8x8xf32, #tpu.memory_space<vmem>>, vector<8x8xf32>
    %c0_7 = arith.constant 0 : index
    %c0_8 = arith.constant 0 : index
    %4 = vector.load %arg2[%c0_7, %c0_8] : memref<8x32xbf16, #tpu.memory_space<vmem>>, vector<8x32xbf16>
    %5 = arith.truncf %3 : vector<8x8xf32> to vector<8x8xbf16>
    %cst = arith.constant dense<0.000000e+00> : vector<8x32xf32>
    %6 = tpu.matmul %5, %4, %cst {dimension_numbers = #tpu.dot_dimension_numbers<[1], [0], [0], [1], [0, 0, 1, 1], [], []>} : vector<8x8xbf16>, vector<8x32xbf16>, vector<8x32xf32> -> vector<8x32xf32>
    %7 = vector.broadcast %0 : vector<1x32xf32> to vector<8x32xf32>
    %8 = arith.addf %6, %7 : vector<8x32xf32>
    %cst_9 = arith.constant 0.000000e+00 : f32
    %9 = vector.broadcast %cst_9 : f32 to vector<8x32xf32>
    %10 = arith.maximumf %8, %9 : vector<8x32xf32>
    %c0_10 = arith.constant 0 : index
    %c0_11 = arith.constant 0 : index
    %11 = vector.load %arg4[%c0_10, %c0_11] : memref<32x32xbf16, #tpu.memory_space<vmem>>, vector<32x32xbf16>
    %12 = arith.truncf %10 : vector<8x32xf32> to vector<8x32xbf16>
    %cst_12 = arith.constant dense<0.000000e+00> : vector<8x32xf32>
    %13 = tpu.matmul %12, %11, %cst_12 {dimension_numbers = #tpu.dot_dimension_numbers<[1], [0], [0], [1], [0, 0, 1, 1], [], []>} : vector<8x32xbf16>, vector<32x32xbf16>, vector<8x32xf32> -> vector<8x32xf32>
    %14 = vector.broadcast %1 : vector<1x32xf32> to vector<8x32xf32>
    %15 = arith.addf %13, %14 : vector<8x32xf32>
    %cst_13 = arith.constant 0.000000e+00 : f32
    %16 = vector.broadcast %cst_13 : f32 to vector<8x32xf32>
    %17 = arith.maximumf %15, %16 : vector<8x32xf32>
    %c0_14 = arith.constant 0 : index
    %c0_15 = arith.constant 0 : index
    %18 = vector.load %arg6[%c0_14, %c0_15] : memref<32x324xbf16, #tpu.memory_space<vmem>>, vector<32x324xbf16>
    %19 = arith.truncf %17 : vector<8x32xf32> to vector<8x32xbf16>
    %cst_16 = arith.constant dense<0.000000e+00> : vector<8x324xf32>
    %20 = tpu.matmul %19, %18, %cst_16 {dimension_numbers = #tpu.dot_dimension_numbers<[1], [0], [0], [1], [0, 0, 1, 1], [], []>} : vector<8x32xbf16>, vector<32x324xbf16>, vector<8x324xf32> -> vector<8x324xf32>
    %21 = vector.broadcast %2 : vector<1x324xf32> to vector<8x324xf32>
    %22 = arith.addf %20, %21 : vector<8x324xf32>
    %c0_17 = arith.constant 0 : index
    %c0_18 = arith.constant 0 : index
    %23 = vector.load %arg8[%c0_17, %c0_18] : memref<8x324xf32, #tpu.memory_space<vmem>>, vector<8x324xf32>
    tpu.vector_store %arg8[%c0_17, %c0_18], %22 {strides = array<i32>} : memref<8x324xf32, #tpu.memory_space<vmem>>, vector<8x324xf32>,
    return
  }
  func.func @transform_0(%arg0: i32) -> (i32, i32) {
    %c0_i32 = arith.constant 0 : i32
    %c0_i32_0 = arith.constant 0 : i32
    return %arg0, %c0_i32 : i32, i32
  }
  func.func @transform_1(%arg0: i32) -> (i32, i32) {
    %c0_i32 = arith.constant 0 : i32
    %c0_i32_0 = arith.constant 0 : i32
    %c0_i32_1 = arith.constant 0 : i32
    return %c0_i32, %c0_i32_0 : i32, i32
  }
  func.func @transform_2(%arg0: i32) -> (i32, i32) {
    %c0_i32 = arith.constant 0 : i32
    %c0_i32_0 = arith.constant 0 : i32
    %c0_i32_1 = arith.constant 0 : i32
    return %c0_i32, %c0_i32_0 : i32, i32
  }
  func.func @transform_3(%arg0: i32) -> (i32, i32) {
    %c0_i32 = arith.constant 0 : i32
    %c0_i32_0 = arith.constant 0 : i32
    %c0_i32_1 = arith.constant 0 : i32
    return %c0_i32, %c0_i32_0 : i32, i32
  }
  func.func @transform_4(%arg0: i32) -> (i32, i32) {
    %c0_i32 = arith.constant 0 : i32
    %c0_i32_0 = arith.constant 0 : i32
    %c0_i32_1 = arith.constant 0 : i32
    return %c0_i32, %c0_i32_0 : i32, i32
  }
  func.func @transform_5(%arg0: i32) -> (i32, i32) {
    %c0_i32 = arith.constant 0 : i32
    %c0_i32_0 = arith.constant 0 : i32
    %c0_i32_1 = arith.constant 0 : i32
    return %c0_i32, %c0_i32_0 : i32, i32
  }
  func.func @transform_6(%arg0: i32) -> (i32, i32) {
    %c0_i32 = arith.constant 0 : i32
    %c0_i32_0 = arith.constant 0 : i32
    %c0_i32_1 = arith.constant 0 : i32
    return %c0_i32, %c0_i32_0 : i32, i32
  }
  func.func @transform_7(%arg0: i32) -> (i32, i32) {
    %c0_i32 = arith.constant 0 : i32
    %c0_i32_0 = arith.constant 0 : i32
    return %arg0, %c0_i32 : i32, i32
  }
}

</mosaic_0001>

<llo_original>
// kernel: tpu_custom_call.1
$region0: #{tpu_custom_call.1}
  #allocation0 [shape = 'u32[]', space=smem, size = 0x4, offset = 0x4, fixed_abs, tag = 'smem constant byte address 0x4 - core index']
  #allocation1 [shape = 'u32[72,128]{1,0:T(1,128)}', space=vmem, size = 0x9000, scoped, tag = 'internal scratch']
  %s0 = inlined_call_operand.hbm [shape: f32[8,8], index: 0, kind: input, shape index: {}]
  %s1 = inlined_call_operand.hbm [shape: bf16[8,32], index: 1, kind: input, shape index: {}]
  %s2 = inlined_call_operand.vmem [shape: f32[1,32], index: 2, kind: input, shape index: {}]
  %s3 = inlined_call_operand.hbm [shape: bf16[32,32], index: 3, kind: input, shape index: {}]
  %s4 = inlined_call_operand.vmem [shape: f32[1,32], index: 4, kind: input, shape index: {}]
  %s5 = inlined_call_operand.hbm [shape: bf16[32,324], index: 5, kind: input, shape index: {}]
  %s6 = inlined_call_operand.vmem [shape: f32[1,324], index: 6, kind: input, shape index: {}]
  %s7 = inlined_call_operand.hbm [shape: f32[8,324], index: 7, kind: output, shape index: {}]
  %s8 = sld [smem:[#allocation0]]
  $region54: #{tpu_custom_call.1} parent=0
    _
  %s10 = ssub.s32 1, %s8
  %s11 = scalar_select 0, %s10, %s8
  $region1: #{tpu_custom_call.1} parent=0
    #allocation2 [shape = 'u8[4096]{0}', space=vmem, size = 0x1000, scoped, tag = 'input window, operand 0, single buffered']
    #allocation3 [shape = 's32[1]{0}', space=sflag, size = 0x4, scoped, tag = 'scoped memory for tpu_custom_call.1']
    #allocation4 [shape = 's32[1]{0}', space=sflag, size = 0x4, scoped, tag = 'scoped memory for tpu_custom_call.1']
    #allocation5 [shape = 'u8[2048]{0}', space=vmem, size = 0x800, scoped, tag = 'input window, operand 1, single buffered']
    #allocation6 [shape = 's32[1]{0}', space=sflag, size = 0x4, scoped, tag = 'scoped memory for tpu_custom_call.1']
    #allocation7 [shape = 'u8[8192]{0}', space=vmem, size = 0x2000, scoped, tag = 'input window, operand 3, single buffered']
    #allocation8 [shape = 'u8[24576]{0}', space=vmem, size = 0x6000, scoped, tag = 'input window, operand 5, single buffered']
    #allocation9 [shape = 's32[1]{0}', space=sflag, size = 0x4, scoped, tag = 'scoped memory for tpu_custom_call.1']
    #allocation10 [shape = 'u8[12288]{0}', space=vmem, size = 0x3000, scoped, tag = 'output window, operand 0, single buffered']
    %12 = vsyncpa [#allocation3], 0
    %13 = vsyncpa [#allocation6], 0
    %14 = vsyncpa [#allocation9], 0
    %15 = vsyncpa [#allocation4], 0
    // Predicated region
    $region2: #{tpu_custom_call.1} parent=1 // pred_check
      _
    $region3: #{tpu_custom_call.1} parent=1 // pred_check_branch
      %17 = sbr.rel (0) target = $region5
    $region4: #{tpu_custom_call.1} parent=1 // pred_region
      %19 = vsyncadd [#allocation3], 0
      %s21 = sshll.u32 %s0, 4
      %s22 = int_to_ptr.hbm [resolvable:$true] %s21
      %s23 = sshll.u32 [#allocation2], 4
      %s24 = int_to_ptr.vmem [resolvable:$true] %s23
      %26 = dma.hbm_to_vmem [thread:$0]  %s22, 128, %s24, [#allocation3]
    $region5: #{tpu_custom_call.1} parent=1 // pred_fallthru
      _
    // Predicated region
    $region6: #{tpu_custom_call.1} parent=1 // pred_check
      _
    $region7: #{tpu_custom_call.1} parent=1 // pred_check_branch
      %28 = sbr.rel (0) target = $region9
    $region8: #{tpu_custom_call.1} parent=1 // pred_region
      %30 = vsyncadd [#allocation6], 0
      %s32 = sshll.u32 %s1, 4
      %s33 = int_to_ptr.hbm [resolvable:$true] %s32
      %s34 = sshll.u32 [#allocation5], 4
      %s35 = int_to_ptr.vmem [resolvable:$true] %s34
      %37 = dma.hbm_to_vmem [thread:$0]  %s33, 64, %s35, [#allocation6]
    $region9: #{tpu_custom_call.1} parent=1 // pred_fallthru
      _
    // Predicated region
    $region10: #{tpu_custom_call.1} parent=1 // pred_check
      _
    $region11: #{tpu_custom_call.1} parent=1 // pred_check_branch
      %39 = sbr.rel (0) target = $region13
    $region12: #{tpu_custom_call.1} parent=1 // pred_region
      _
    $region13: #{tpu_custom_call.1} parent=1 // pred_fallthru
      _
    // Predicated region
    $region14: #{tpu_custom_call.1} parent=1 // pred_check
      _
    $region15: #{tpu_custom_call.1} parent=1 // pred_check_branch
      %41 = sbr.rel (0) target = $region17
    $region16: #{tpu_custom_call.1} parent=1 // pred_region
      %43 = vsyncadd [#allocation6], 0
      %s44 = sshll.u32 %s3, 4
      %s45 = int_to_ptr.hbm [resolvable:$true] %s44
      %s46 = sshll.u32 [#allocation7], 4
      %s47 = int_to_ptr.vmem [resolvable:$true] %s46
      %52 = dma.hbm_to_vmem [thread:$0]  %s45, 256, %s47, [#allocation6], 64, 64, 4
    $region17: #{tpu_custom_call.1} parent=1 // pred_fallthru
      _
    // Predicated region
    $region18: #{tpu_custom_call.1} parent=1 // pred_check
      _
    $region19: #{tpu_custom_call.1} parent=1 // pred_check_branch
      %54 = sbr.rel (0) target = $region21
    $region20: #{tpu_custom_call.1} parent=1 // pred_region
      _
    $region21: #{tpu_custom_call.1} parent=1 // pred_fallthru
      _
    // Predicated region
    $region22: #{tpu_custom_call.1} parent=1 // pred_check
      _
    $region23: #{tpu_custom_call.1} parent=1 // pred_check_branch
      %56 = sbr.rel (0) target = $region25
    $region24: #{tpu_custom_call.1} parent=1 // pred_region
      %58 = vsyncadd [#allocation9], 0
      %s59 = sshll.u32 %s5, 4
      %s60 = int_to_ptr.hbm [resolvable:$true] %s59
      %s61 = sshll.u32 [#allocation8], 4
      %s62 = int_to_ptr.vmem [resolvable:$true] %s61
      %67 = dma.hbm_to_vmem [thread:$0]  %s60, 768, %s62, [#allocation9], 192, 192, 12
    $region25: #{tpu_custom_call.1} parent=1 // pred_fallthru
      _
    // Predicated region
    $region26: #{tpu_custom_call.1} parent=1 // pred_check
      _
    $region27: #{tpu_custom_call.1} parent=1 // pred_check_branch
      %69 = sbr.rel (0) target = $region29
    $region28: #{tpu_custom_call.1} parent=1 // pred_region
      _
    $region29: #{tpu_custom_call.1} parent=1 // pred_fallthru
      _
    // Predicated region
    $region30: #{tpu_custom_call.1} parent=1 // pred_check
      _
    $region31: #{tpu_custom_call.1} parent=1 // pred_check_branch
      %71 = sbr.rel (0) target = $region33
    $region32: #{tpu_custom_call.1} parent=1 // pred_region
      %73 = dma.done [#allocation3], 128
    $region33: #{tpu_custom_call.1} parent=1 // pred_fallthru
      _
    // Predicated region
    $region34: #{tpu_custom_call.1} parent=1 // pred_check
      _
    $region35: #{tpu_custom_call.1} parent=1 // pred_check_branch
      %75 = sbr.rel (0) target = $region37
    $region36: #{tpu_custom_call.1} parent=1 // pred_region
      %77 = dma.done [#allocation6], 64
    $region37: #{tpu_custom_call.1} parent=1 // pred_fallthru
      _
    // Predicated region
    $region38: #{tpu_custom_call.1} parent=1 // pred_check
      _
    $region39: #{tpu_custom_call.1} parent=1 // pred_check_branch
      %79 = sbr.rel (0) target = $region41
    $region40: #{tpu_custom_call.1} parent=1 // pred_region
      %81 = dma.done [#allocation6], 256
    $region41: #{tpu_custom_call.1} parent=1 // pred_fallthru
      _
    // Predicated region
    $region42: #{tpu_custom_call.1} parent=1 // pred_check
      _
    $region43: #{tpu_custom_call.1} parent=1 // pred_check_branch
      %83 = sbr.rel (0) target = $region45
    $region44: #{tpu_custom_call.1} parent=1 // pred_region
      %85 = dma.done [#allocation9], 768
    $region45: #{tpu_custom_call.1} parent=1 // pred_fallthru
      _
    %v87 = vld [vmem:[%s2] sm:$0x1]
    %v88 = vld [vmem:[%s4] sm:$0x1]
    %v89 = vld [vmem:[%s6] sm:$0x7]
    %v90 = vld [vmem:[#allocation2] sm:$0xff]
    %v91 = vld [vmem:[#allocation5] sm:$0xf]
    %v92 = vpack.c.bf16 %v90, %v90
    %v94 = vperm.slane %v87, 0
    %vm96 = vcmask 64512
    %v98 = vsel %vm96, %v92, 0
    %vm100 = vcmask 1043456
    %v102 = vsel %vm100, %v91, 0
    %104 = vmatpush.bf16.msra.mxu0 0
    %105 = vmatpush.bf16.msra.mxu0 0
    %106 = vmatpush.bf16.msra.mxu0 0
    %107 = vmatpush.bf16.msra.mxu0 0
    %108 = vmatpush.bf16.msra.mxu0 0
    %109 = vmatpush.bf16.msra.mxu0 0
    %110 = vmatpush.bf16.msra.mxu0 0
    %111 = vmatpush.bf16.msra.mxu0 %v102
    %112 = vmatmul.bf16.gmra.mxu0 %v98
    %v113 = vpop.f32.mrf.mxu0
    %v114 = vadd.f32 %v94, %v113
    %v115 = vpop.f32.mrf.mxu0
    %116 = vdwg.mxu0
    %v117 = vmax.f32 %v114, 0.0
    %v118 = vld [vmem:[#allocation7] sm:$0xf]
    %v119 = vld [vmem:[#allocation7 + $0x4] sm:$0xf]
    %v120 = vld [vmem:[#allocation7 + $0x8] sm:$0xf]
    %v121 = vld [vmem:[#allocation7 + $0xc] sm:$0xf]
    %v122 = vpack.c.bf16 %v117, %v117
    %v124 = vperm.slane %v88, 0
    %v130 = vunpack.c.l.b16 %v118
    %v131 = vunpack.c.l.b16 %v119
    %v132 = vunpack.c.l.b16 %v120
    %v133 = vunpack.c.l.b16 %v121
    %v134 = vpack.c.b16 %v131, %v130
    %v135 = vpack.c.b16 %v133, %v132
    %vm138 = vcmask 261120
    %v140 = vsel %vm138, %v122, 0
    %142 = vmatpush.bf16.msra.mxu0 0
    %143 = vmatpush.bf16.msra.mxu0 0
    %144 = vmatpush.bf16.msra.mxu0 0
    %145 = vmatpush.bf16.msra.mxu0 0
    %146 = vmatpush.bf16.msra.mxu0 0
    %147 = vmatpush.bf16.msra.mxu0 0
    %148 = vmatpush.bf16.msra.mxu0 %v135
    %149 = vmatpush.bf16.msra.mxu0 %v134
    %150 = vmatmul.bf16.gmra.mxu0 %v140
    %v151 = vpop.f32.mrf.mxu0
    %v152 = vadd.f32 %v124, %v151
    %v153 = vpop.f32.mrf.mxu0
    %154 = vdwg.mxu0
    %v155 = vmax.f32 %v152, 0.0
    %v156 = vld [vmem:[#allocation8] sm:$0xff]
    %v157 = vld [vmem:[#allocation8 + $0x8] sm:$0xf]
    %v158 = vld [vmem:[#allocation8 + $0xc] sm:$0xff]
    %v159 = vld [vmem:[#allocation8 + $0x14] sm:$0xf]
    %v160 = vld [vmem:[#allocation8 + $0x18] sm:$0xff]
    %v161 = vld [vmem:[#allocation8 + $0x20] sm:$0xf]
    %v162 = vld [vmem:[#allocation8 + $0x24] sm:$0xff]
    %v163 = vld [vmem:[#allocation8 + $0x2c] sm:$0xf]
    %v164 = vpack.c.bf16 %v155, %v155
    %v166 = vperm.slane %v89, 0
    %v167 = vperm.slane %v89, 1
    %v168 = vperm.slane %v89, 2
    %v180 = vunpack.c.l.b16 %v156
    %v181 = vunpack.c.h.b16 %v156
    %v182 = vunpack.c.l.b16 %v157
    %v183 = vunpack.c.l.b16 %v158
    %v184 = vunpack.c.h.b16 %v158
    %v185 = vunpack.c.l.b16 %v159
    %v186 = vunpack.c.l.b16 %v160
    %v187 = vunpack.c.h.b16 %v160
    %v188 = vunpack.c.l.b16 %v161
    %v189 = vunpack.c.l.b16 %v162
    %v190 = vunpack.c.h.b16 %v162
    %v191 = vunpack.c.l.b16 %v163
    %v192 = vpack.c.b16 %v183, %v180
    %v193 = vpack.c.b16 %v184, %v181
    %v194 = vpack.c.b16 %v185, %v182
    %v195 = vpack.c.b16 %v189, %v186
    %v196 = vpack.c.b16 %v190, %v187
    %v197 = vpack.c.b16 %v191, %v188
    %v205 = vsel %vm138, %v164, 0
    %207 = vmatpush.bf16.msra.mxu0 0
    %208 = vmatpush.bf16.msra.mxu0 0
    %209 = vmatpush.bf16.msra.mxu0 0
    %210 = vmatpush.bf16.msra.mxu0 0
    %211 = vmatpush.bf16.msra.mxu0 0
    %212 = vmatpush.bf16.msra.mxu0 0
    %213 = vmatpush.bf16.msra.mxu0 %v195
    %214 = vmatpush.bf16.msra.mxu0 %v192
    %215 = vmatmul.bf16.gmra.mxu0 %v205
    %v216 = vpop.f32.mrf.mxu0
    %v217 = vadd.f32 %v166, %v216
    %v218 = vpop.f32.mrf.mxu0
    %219 = vdwg.mxu0
    %220 = vmatpush.bf16.msra.mxu0 0
    %221 = vmatpush.bf16.msra.mxu0 0
    %222 = vmatpush.bf16.msra.mxu0 0
    %223 = vmatpush.bf16.msra.mxu0 0
    %224 = vmatpush.bf16.msra.mxu0 0
    %225 = vmatpush.bf16.msra.mxu0 0
    %226 = vmatpush.bf16.msra.mxu0 %v196
    %227 = vmatpush.bf16.msra.mxu0 %v193
    %228 = vmatmul.bf16.gmra.mxu0 %v205
    %v229 = vpop.f32.mrf.mxu0
    %v230 = vadd.f32 %v167, %v229
    %v231 = vpop.f32.mrf.mxu0
    %232 = vdwg.mxu0
    %233 = vmatpush.bf16.msra.mxu0 0
    %234 = vmatpush.bf16.msra.mxu0 0
    %235 = vmatpush.bf16.msra.mxu0 0
    %236 = vmatpush.bf16.msra.mxu0 0
    %237 = vmatpush.bf16.msra.mxu0 0
    %238 = vmatpush.bf16.msra.mxu0 0
    %239 = vmatpush.bf16.msra.mxu0 %v197
    %240 = vmatpush.bf16.msra.mxu0 %v194
    %241 = vmatmul.bf16.gmra.mxu0 %v205
    %v242 = vpop.f32.mrf.mxu0
    %v243 = vadd.f32 %v168, %v242
    %v244 = vpop.f32.mrf.mxu0
    %245 = vdwg.mxu0
    %246 = vst [vmem:[#allocation10] sm:$0xff] %v217
    %247 = vst [vmem:[#allocation10 + $0x8] sm:$0xff] %v230
    %vm248 = vcmask 556032
    %249 = vst.msk [vmem:[#allocation10 + $0x10] sm:$0xff] %vm248, %v243
    // Predicated region
    $region46: #{tpu_custom_call.1} parent=1 // pred_check
      _
    $region47: #{tpu_custom_call.1} parent=1 // pred_check_branch
      %251 = sbr.rel (0) target = $region49
    $region48: #{tpu_custom_call.1} parent=1 // pred_region
      %253 = vsyncadd [#allocation4], 0
      %s255 = sshll.u32 [#allocation10], 4
      %s256 = int_to_ptr.vmem [resolvable:$true] %s255
      %s257 = sshll.u32 %s7, 4
      %s258 = int_to_ptr.hbm [resolvable:$true] %s257
      %260 = dma.vmem_to_hbm [thread:$0]  %s256, 384, %s258, [#allocation4]
    $region49: #{tpu_custom_call.1} parent=1 // pred_fallthru
      _
    // Predicated region
    $region50: #{tpu_custom_call.1} parent=1 // pred_check
      _
    $region51: #{tpu_custom_call.1} parent=1 // pred_check_branch
      %262 = sbr.rel (0) target = $region53
    $region52: #{tpu_custom_call.1} parent=1 // pred_region
      %264 = dma.done [#allocation4], 384
    $region53: #{tpu_custom_call.1} parent=1 // pred_fallthru
      _
    %265 = vsyncpa [#allocation3], 1
    %266 = vsyncpa [#allocation6], 1
    %267 = vsyncpa [#allocation9], 1
    %268 = vsyncpa [#allocation4], 1

</llo_original>
